<compile_context>
chip_gen: v6e
topology: v6e:2x2x1
jax: 0.10.0
libtpu: 0.0.40
codegen_flags: <defaults>
</compile_context>

<pallas_src>
import jax
import jax.numpy as jnp
from jax.experimental import pallas as pl
from jax.experimental.pallas import tpu as pltpu

DIN = 8
D1, D2, D3, D4 = 64, 32, 16, 1
OFF1, OFF2, OFF3, OFF4 = 0, D1, D1 + D2, D1 + D2 + D3      # 0, 64, 96, 112
SLAB = 128                                                  # lane-dense slab width
_MIN_SPLIT = 1024   # below this batch, a second grid step is pure overhead


def _round_up(n, m):
    return ((n + m - 1) // m) * m


def _cdiv(a, b):
    return -(-a // b)


def mainnet_kernel(x_ref, w1_ref, w2_ref, w3_ref, w4_ref, b_ref, out_ref):
    """All four layers computed in one lane-dense [tb, 128] slab.

    Weights were pre-placed (wrapper) at their slab lane offsets, so every
    layer is one MXU push + one VPU add/relu and its output lands directly in
    its final lanes: [x1(0..63) | x2(64..95) | x3(96..111) | pred(112) | 0s].
    No in-kernel concatenate / pad / cross-lane bias extraction.
    """
    x = x_ref[...]                                  # [tb, 8]
    b = b_ref[...].astype(jnp.float32)              # [4, 128]
    wdt = w1_ref.dtype                               # MXU operand dtype (f32/bf16)

    # fc1 + relu -> lanes 0..63 (all other lanes are exactly 0 afterwards)
    slab = jnp.maximum(
        jnp.dot(x, w1_ref[...], preferred_element_type=jnp.float32) + b[0:1], 0.0)
    # fc2 + relu -> lanes 64..95 (reads lanes 0..63); other lanes get += 0
    slab = slab + jnp.maximum(
        jnp.dot(slab.astype(wdt), w2_ref[...],
                preferred_element_type=jnp.float32) + b[1:2], 0.0)
    # fc3 + relu -> lanes 96..111 (reads lanes 64..95)
    slab = slab + jnp.maximum(
        jnp.dot(slab.astype(wdt), w3_ref[...],
                preferred_element_type=jnp.float32) + b[2:3], 0.0)
    # fc4 (no relu) -> lane 112 (reads lanes 96..111); lanes 113..127 stay 0
    slab = slab + (jnp.dot(slab.astype(wdt), w4_ref[...],
                           preferred_element_type=jnp.float32) + b[3:4])

    out_ref[...] = slab.astype(out_ref.dtype)


def _as_row(b):
    b = jnp.asarray(b, jnp.float32)
    return b.reshape(1, -1)               # accepts torch-style 1-D or (1, out)


def _pack_params(params, mxu_dtype):
    """Pad weights/biases into slab-lane-offset layout. Biases stay f32."""
    (w1, b1), (w2, b2), (w3, b3), (w4, b4) = params
    b1, b2, b3, b4 = map(_as_row, (b1, b2, b3, b4))
    w1 = jnp.asarray(w1, jnp.float32)
    w2 = jnp.asarray(w2, jnp.float32)
    w3 = jnp.asarray(w3, jnp.float32)
    w4 = jnp.asarray(w4, jnp.float32)

    w1p = jnp.zeros((DIN, SLAB), jnp.float32).at[:, OFF1:OFF1 + D1].set(w1)
    w2p = jnp.zeros((SLAB, SLAB), jnp.float32
                    ).at[OFF1:OFF1 + D1, OFF2:OFF2 + D2].set(w2)
    w3p = jnp.zeros((SLAB, SLAB), jnp.float32
                    ).at[OFF2:OFF2 + D2, OFF3:OFF3 + D3].set(w3)
    w4p = jnp.zeros((SLAB, SLAB), jnp.float32
                    ).at[OFF3:OFF3 + D3, OFF4:OFF4 + D4].set(w4)

    bstack = jnp.zeros((4, SLAB), jnp.float32)
    bstack = bstack.at[0, OFF1:OFF1 + D1].set(b1[0])
    bstack = bstack.at[1, OFF2:OFF2 + D2].set(b2[0])
    bstack = bstack.at[2, OFF3:OFF3 + D3].set(b3[0])
    bstack = bstack.at[3, OFF4:OFF4 + D4].set(b4[0])

    wd = jnp.float32 if mxu_dtype is None else mxu_dtype
    return (w1p.astype(wd), w2p.astype(wd), w3p.astype(wd), w4p.astype(wd),
            bstack)


def _pick_tile(B, tb):
    if tb is None:
        tb = 4096                           # sweep 2048-4096; per-step overhead amortized
    tb = max(16, _round_up(tb, 16))         # multiple of 16: bf16 (16,128) tiles
    tb = min(tb, _round_up(B, 16))          # never bigger than the (padded) batch
    # v7x has 2 TensorCores: give the "parallel" grid axis >= 2 steps when the
    # batch is large enough that the extra step isn't pure overhead.
    if B >= _MIN_SPLIT and _cdiv(B, tb) < 2:
        tb = _round_up(_cdiv(B, 2), 16)
    return tb


def mainnet_forward(x, params, *, tb=None, mxu_dtype=None, out_dtype=None,
                    return_slab=False):
    """MainNet forward.

    x: [B, 8].  Returns (pred [B,1], [x1, x2, x3]) like the PyTorch module, or
    the raw lane-dense slab [B, 128] if return_slab=True (lanes 113..127 are
    deterministically zero) so downstream consumers can skip the re-slicing
    HBM round-trip.
    mxu_dtype: e.g. jnp.bfloat16 on v6e/v7x (f32 accumulation kept).
    out_dtype: slab/output dtype (bf16 halves output HBM bytes).
    """
    x = jnp.asarray(x)
    B, Din = x.shape
    assert Din == DIN
    out_dtype = x.dtype if out_dtype is None else out_dtype

    w1p, w2p, w3p, w4p, bstack = _pack_params(params, mxu_dtype)
    if mxu_dtype is not None:
        x = x.astype(mxu_dtype)

    tb = _pick_tile(B, tb)
    B_pad = _round_up(B, tb)
    if B_pad != B:
        x = jnp.pad(x, ((0, B_pad - B), (0, 0)))

    grid = (B_pad // tb,)

    def resident(shape):
        # full-array block + constant index map -> stays in VMEM across steps.
        return pl.BlockSpec(shape, lambda i: (0, 0))

    in_specs = [
        pl.BlockSpec((tb, DIN), lambda i: (i, 0)),   # x tile
        resident((DIN, SLAB)),                       # W1 padded
        resident((SLAB, SLAB)),                      # W2 padded
        resident((SLAB, SLAB)),                      # W3 padded
        resident((SLAB, SLAB)),                      # W4 padded
        resident((4, SLAB)),                         # biases, slab-aligned
    ]
    out_specs = pl.BlockSpec((tb, SLAB), lambda i: (i, 0))
    out_shape = jax.ShapeDtypeStruct((B_pad, SLAB), out_dtype)

    slab = pl.pallas_call(
        mainnet_kernel,
        grid=grid,
        in_specs=in_specs,
        out_specs=out_specs,
        out_shape=out_shape,
        compiler_params=pltpu.CompilerParams(
            dimension_semantics=("parallel",),
            # Worst case (tb=4096, f32): ~8 MiB double-buffered -> plenty of
            # headroom on v5e/v6e (128 MiB) and v7x (64 MiB physical).
            vmem_limit_bytes=32 * 1024 * 1024,
        ),
    )(x, w1p, w2p, w3p, w4p, bstack)

    slab = slab[:B]                     # drop batch padding
    if return_slab:
        return slab                     # consumer slices at OFF1/OFF2/OFF3/OFF4

    # TODO(synk): fuse the LL4AL LossNet head into this kernel so x1/x2/x3
    # never round-trip through HBM; the splits below are the remaining cost.
    x1 = slab[:, OFF1:OFF1 + D1]
    x2 = slab[:, OFF2:OFF2 + D2]
    x3 = slab[:, OFF3:OFF3 + D3]
    pred = slab[:, OFF4:OFF4 + D4]
    return pred, [x1, x2, x3]


def init_params(key):
    """PyTorch nn.Linear default init: U(-1/sqrt(fan_in), 1/sqrt(fan_in)).
    Weights stored [in, out] (transposed vs. torch), biases 1-D like torch."""
    dims = [(DIN, D1), (D1, D2), (D2, D3), (D3, D4)]
    params = []
    for fan_in, fan_out in dims:
        key, kw, kb = jax.random.split(key, 3)
        bound = 1.0 / jnp.sqrt(jnp.float32(fan_in))
        w = jax.random.uniform(kw, (fan_in, fan_out), jnp.float32, -bound, bound)
        b = jax.random.uniform(kb, (fan_out,), jnp.float32, -bound, bound)
        params.append((w, b))
    return params


def mainnet_ref(x, params):
    h = jnp.asarray(x, jnp.float32)
    feats = []
    for i, (w, b) in enumerate(params):
        h = h @ w + b.reshape(1, -1)
        if i < 3:
            h = jnp.maximum(h, 0.0)
            feats.append(h)
    return h, feats


def _check(x, params, atol=1e-5, **kw):
    pred, feats = mainnet_forward(x, params, **kw)
    pred = jax.block_until_ready(pred)
    feats = [jax.block_until_ready(f) for f in feats]
    ref_pred, ref_feats = mainnet_ref(x, params)
    assert pred.shape == ref_pred.shape
    assert jnp.allclose(pred.astype(jnp.float32), ref_pred, atol=atol), "pred mismatch"
    for f, rf in zip(feats, ref_feats):
        assert f.shape == rf.shape
        assert jnp.allclose(f.astype(jnp.float32), rf, atol=atol), "feature mismatch"


if __name__ == "__main__":
    key = jax.random.PRNGKey(0)
    key, kx_small, kx_big = jax.random.split(key, 3)
    params = init_params(key)

    # Small-shape check (batch=8, single grid step), f32 end to end.
    x_small = jax.random.normal(kx_small, (8, DIN), jnp.float32)
    _check(x_small, params, atol=1e-5)

    # Larger batch: exercises batch padding and the TC-aware split
    # (tb -> 1024, grid=(2,): both v7x TensorCores busy).
    x_big = jax.random.normal(kx_big, (2040, DIN), jnp.float32)
    _check(x_big, params, atol=1e-5)

    # bf16 fast path (v6e/v7x): bf16 MXU operands + bf16 output slab,
    # f32 accumulation.  Looser tolerance is expected, not a bug.
    _check(x_big, params, atol=1e-1,
           mxu_dtype=jnp.bfloat16, out_dtype=jnp.bfloat16)

    # Raw-slab path (lane-dense [B,128], pad lanes are exactly 0).
    slab = jax.block_until_ready(mainnet_forward(x_big, params, return_slab=True))
    assert slab.shape == (2040, SLAB)
    assert jnp.all(slab[:, OFF4 + D4:] == 0.0), "pad lanes must be zero"

    print("KERNEL_OK")
</pallas_src>

<mosaic_0001>
module attributes {stable_mosaic.version = 11 : i64} {
  func.func @mainnet_kernel(%arg0: i32, %arg1: memref<16x8xf32, #tpu.memory_space<vmem>>, %arg2: memref<8x128xf32, #tpu.memory_space<vmem>>, %arg3: memref<128x128xf32, #tpu.memory_space<vmem>>, %arg4: memref<128x128xf32, #tpu.memory_space<vmem>>, %arg5: memref<128x128xf32, #tpu.memory_space<vmem>>, %arg6: memref<4x128xf32, #tpu.memory_space<vmem>>, %arg7: memref<16x128xf32, #tpu.memory_space<vmem>>) attributes {dimension_semantics = [#tpu.dimension_semantics<parallel>], iteration_bounds = array<i64: 1>, scalar_prefetch = 0 : i64, scratch_operands = 0 : i64, tpu.core_type = #tpu.core_type<tc>, window_params = [{transform_indices = @transform_0, window_bounds = array<i64: 16, 8>}, {pipeline_mode = #tpu.pipeline_mode<synchronous>, transform_indices = @transform_1, window_bounds = array<i64: 8, 128>}, {pipeline_mode = #tpu.pipeline_mode<synchronous>, transform_indices = @transform_2, window_bounds = array<i64: 128, 128>}, {pipeline_mode = #tpu.pipeline_mode<synchronous>, transform_indices = @transform_3, window_bounds = array<i64: 128, 128>}, {pipeline_mode = #tpu.pipeline_mode<synchronous>, transform_indices = @transform_4, window_bounds = array<i64: 128, 128>}, {pipeline_mode = #tpu.pipeline_mode<synchronous>, transform_indices = @transform_5, window_bounds = array<i64: 4, 128>}, {transform_indices = @transform_6, window_bounds = array<i64: 16, 128>}]} {
    %c0 = arith.constant 0 : index
    %c0_0 = arith.constant 0 : index
    %0 = vector.load %arg1[%c0, %c0_0] : memref<16x8xf32, #tpu.memory_space<vmem>>, vector<16x8xf32>
    %c0_1 = arith.constant 0 : index
    %c0_2 = arith.constant 0 : index
    %1 = vector.load %arg6[%c0_1, %c0_2] : memref<4x128xf32, #tpu.memory_space<vmem>>, vector<4x128xf32>
    %c0_3 = arith.constant 0 : index
    %c0_4 = arith.constant 0 : index
    %2 = vector.load %arg2[%c0_3, %c0_4] : memref<8x128xf32, #tpu.memory_space<vmem>>, vector<8x128xf32>
    %cst = arith.constant dense<0.000000e+00> : vector<16x128xf32>
    %3 = tpu.matmul %0, %2, %cst {dimension_numbers = #tpu.dot_dimension_numbers<[1], [0], [0], [1], [0, 0, 1, 1], [], []>} : vector<16x8xf32>, vector<8x128xf32>, vector<16x128xf32> -> vector<16x128xf32>
    %4 = vector.extract_strided_slice %1 {offsets = [0, 0], sizes = [1, 128], strides = [1, 1]} : vector<4x128xf32> to vector<1x128xf32>
    %5 = vector.broadcast %4 : vector<1x128xf32> to vector<16x128xf32>
    %6 = arith.addf %3, %5 : vector<16x128xf32>
    %cst_5 = arith.constant 0.000000e+00 : f32
    %7 = vector.broadcast %cst_5 : f32 to vector<16x128xf32>
    %8 = arith.maximumf %6, %7 : vector<16x128xf32>
    %c0_6 = arith.constant 0 : index
    %c0_7 = arith.constant 0 : index
    %9 = vector.load %arg3[%c0_6, %c0_7] : memref<128x128xf32, #tpu.memory_space<vmem>>, vector<128x128xf32>
    %cst_8 = arith.constant dense<0.000000e+00> : vector<16x128xf32>
    %10 = tpu.matmul %8, %9, %cst_8 {dimension_numbers = #tpu.dot_dimension_numbers<[1], [0], [0], [1], [0, 0, 1, 1], [], []>} : vector<16x128xf32>, vector<128x128xf32>, vector<16x128xf32> -> vector<16x128xf32>
    %11 = vector.extract_strided_slice %1 {offsets = [1, 0], sizes = [1, 128], strides = [1, 1]} : vector<4x128xf32> to vector<1x128xf32>
    %12 = vector.broadcast %11 : vector<1x128xf32> to vector<16x128xf32>
    %13 = arith.addf %10, %12 : vector<16x128xf32>
    %cst_9 = arith.constant 0.000000e+00 : f32
    %14 = vector.broadcast %cst_9 : f32 to vector<16x128xf32>
    %15 = arith.maximumf %13, %14 : vector<16x128xf32>
    %16 = arith.addf %8, %15 : vector<16x128xf32>
    %c0_10 = arith.constant 0 : index
    %c0_11 = arith.constant 0 : index
    %17 = vector.load %arg4[%c0_10, %c0_11] : memref<128x128xf32, #tpu.memory_space<vmem>>, vector<128x128xf32>
    %cst_12 = arith.constant dense<0.000000e+00> : vector<16x128xf32>
    %18 = tpu.matmul %16, %17, %cst_12 {dimension_numbers = #tpu.dot_dimension_numbers<[1], [0], [0], [1], [0, 0, 1, 1], [], []>} : vector<16x128xf32>, vector<128x128xf32>, vector<16x128xf32> -> vector<16x128xf32>
    %19 = vector.extract_strided_slice %1 {offsets = [2, 0], sizes = [1, 128], strides = [1, 1]} : vector<4x128xf32> to vector<1x128xf32>
    %20 = vector.broadcast %19 : vector<1x128xf32> to vector<16x128xf32>
    %21 = arith.addf %18, %20 : vector<16x128xf32>
    %cst_13 = arith.constant 0.000000e+00 : f32
    %22 = vector.broadcast %cst_13 : f32 to vector<16x128xf32>
    %23 = arith.maximumf %21, %22 : vector<16x128xf32>
    %24 = arith.addf %16, %23 : vector<16x128xf32>
    %c0_14 = arith.constant 0 : index
    %c0_15 = arith.constant 0 : index
    %25 = vector.load %arg5[%c0_14, %c0_15] : memref<128x128xf32, #tpu.memory_space<vmem>>, vector<128x128xf32>
    %cst_16 = arith.constant dense<0.000000e+00> : vector<16x128xf32>
    %26 = tpu.matmul %24, %25, %cst_16 {dimension_numbers = #tpu.dot_dimension_numbers<[1], [0], [0], [1], [0, 0, 1, 1], [], []>} : vector<16x128xf32>, vector<128x128xf32>, vector<16x128xf32> -> vector<16x128xf32>
    %27 = vector.extract_strided_slice %1 {offsets = [3, 0], sizes = [1, 128], strides = [1, 1]} : vector<4x128xf32> to vector<1x128xf32>
    %28 = vector.broadcast %27 : vector<1x128xf32> to vector<16x128xf32>
    %29 = arith.addf %26, %28 : vector<16x128xf32>
    %30 = arith.addf %24, %29 : vector<16x128xf32>
    %c0_17 = arith.constant 0 : index
    %c0_18 = arith.constant 0 : index
    %31 = vector.load %arg7[%c0_17, %c0_18] : memref<16x128xf32, #tpu.memory_space<vmem>>, vector<16x128xf32>
    tpu.vector_store %arg7[%c0_17, %c0_18], %30 {strides = array<i32>} : memref<16x128xf32, #tpu.memory_space<vmem>>, vector<16x128xf32>,
    return
  }
  func.func @transform_0(%arg0: i32) -> (i32, i32) {
    %c0_i32 = arith.constant 0 : i32
    %c0_i32_0 = arith.constant 0 : i32
    return %arg0, %c0_i32 : i32, i32
  }
  func.func @transform_1(%arg0: i32) -> (i32, i32) {
    %c0_i32 = arith.constant 0 : i32
    %c0_i32_0 = arith.constant 0 : i32
    %c0_i32_1 = arith.constant 0 : i32
    return %c0_i32, %c0_i32_0 : i32, i32
  }
  func.func @transform_2(%arg0: i32) -> (i32, i32) {
    %c0_i32 = arith.constant 0 : i32
    %c0_i32_0 = arith.constant 0 : i32
    %c0_i32_1 = arith.constant 0 : i32
    return %c0_i32, %c0_i32_0 : i32, i32
  }
  func.func @transform_3(%arg0: i32) -> (i32, i32) {
    %c0_i32 = arith.constant 0 : i32
    %c0_i32_0 = arith.constant 0 : i32
    %c0_i32_1 = arith.constant 0 : i32
    return %c0_i32, %c0_i32_0 : i32, i32
  }
  func.func @transform_4(%arg0: i32) -> (i32, i32) {
    %c0_i32 = arith.constant 0 : i32
    %c0_i32_0 = arith.constant 0 : i32
    %c0_i32_1 = arith.constant 0 : i32
    return %c0_i32, %c0_i32_0 : i32, i32
  }
  func.func @transform_5(%arg0: i32) -> (i32, i32) {
    %c0_i32 = arith.constant 0 : i32
    %c0_i32_0 = arith.constant 0 : i32
    %c0_i32_1 = arith.constant 0 : i32
    return %c0_i32, %c0_i32_0 : i32, i32
  }
  func.func @transform_6(%arg0: i32) -> (i32, i32) {
    %c0_i32 = arith.constant 0 : i32
    %c0_i32_0 = arith.constant 0 : i32
    return %arg0, %c0_i32 : i32, i32
  }
}

</mosaic_0001>

<llo_original>
// kernel: tpu_custom_call.1
$region0: #{tpu_custom_call.1}
  #allocation0 [shape = 'u32[]', space=smem, size = 0x4, offset = 0x4, fixed_abs, tag = 'smem constant byte address 0x4 - core index']
  #allocation1 [shape = 'u32[144,128]{1,0:T(1,128)}', space=vmem, size = 0x12000, scoped, tag = 'internal scratch']
  %s0 = inlined_call_operand.vmem [shape: f32[16,8], index: 0, kind: input, shape index: {}]
  %s1 = inlined_call_operand.vmem [shape: f32[8,128], index: 1, kind: input, shape index: {}]
  %s2 = inlined_call_operand.hbm [shape: f32[128,128], index: 2, kind: input, shape index: {}]
  %s3 = inlined_call_operand.hbm [shape: f32[128,128], index: 3, kind: input, shape index: {}]
  %s4 = inlined_call_operand.hbm [shape: f32[128,128], index: 4, kind: input, shape index: {}]
  %s5 = inlined_call_operand.vmem [shape: f32[4,128], index: 5, kind: input, shape index: {}]
  %s6 = inlined_call_operand.hbm [shape: f32[16,128], index: 6, kind: output, shape index: {}]
  %s7 = sld [smem:[#allocation0]]
  $region46: #{tpu_custom_call.1} parent=0
    _
  %s9 = ssub.s32 1, %s7
  %s10 = scalar_select 0, %s9, %s7
  $region1: #{tpu_custom_call.1} parent=0
    #allocation2 [shape = 'u8[65536]{0}', space=vmem, size = 0x10000, scoped, tag = 'input window, operand 2, single buffered']
    #allocation3 [shape = 's32[1]{0}', space=sflag, size = 0x4, scoped, tag = 'scoped memory for tpu_custom_call.1']
    #allocation4 [shape = 's32[1]{0}', space=sflag, size = 0x4, scoped, tag = 'scoped memory for tpu_custom_call.1']
    #allocation5 [shape = 'u8[65536]{0}', space=vmem, size = 0x10000, scoped, tag = 'input window, operand 3, single buffered']
    #allocation6 [shape = 's32[1]{0}', space=sflag, size = 0x4, scoped, tag = 'scoped memory for tpu_custom_call.1']
    #allocation7 [shape = 'u8[65536]{0}', space=vmem, size = 0x10000, scoped, tag = 'input window, operand 4, single buffered']
    #allocation8 [shape = 'u8[8192]{0}', space=vmem, size = 0x2000, scoped, tag = 'output window, operand 0, single buffered']
    %11 = vsyncpa [#allocation3], 0
    %12 = vsyncpa [#allocation6], 0
    %13 = vsyncpa [#allocation4], 0
    // Predicated region
    $region2: #{tpu_custom_call.1} parent=1 // pred_check
      _
    $region3: #{tpu_custom_call.1} parent=1 // pred_check_branch
      %15 = sbr.rel (0) target = $region5
    $region4: #{tpu_custom_call.1} parent=1 // pred_region
      _
    $region5: #{tpu_custom_call.1} parent=1 // pred_fallthru
      _
    // Predicated region
    $region6: #{tpu_custom_call.1} parent=1 // pred_check
      _
    $region7: #{tpu_custom_call.1} parent=1 // pred_check_branch
      %17 = sbr.rel (0) target = $region9
    $region8: #{tpu_custom_call.1} parent=1 // pred_region
      _
    $region9: #{tpu_custom_call.1} parent=1 // pred_fallthru
      _
    // Predicated region
    $region10: #{tpu_custom_call.1} parent=1 // pred_check
      _
    $region11: #{tpu_custom_call.1} parent=1 // pred_check_branch
      %19 = sbr.rel (0) target = $region13
    $region12: #{tpu_custom_call.1} parent=1 // pred_region
      %s21 = ssub.s32 2048, 2048
      %22 = vsyncadd [#allocation3], %s21
      %s23 = sshll.u32 [#allocation2], 4
      %s24 = int_to_ptr.vmem [resolvable:$true] %s23
      %29 = dma.hbm_to_vmem [thread:$0]  %s2, 2048, %s24, [#allocation3], 128, 128, 8
    $region13: #{tpu_custom_call.1} parent=1 // pred_fallthru
      _
    // Predicated region
    $region14: #{tpu_custom_call.1} parent=1 // pred_check
      _
    $region15: #{tpu_custom_call.1} parent=1 // pred_check_branch
      %31 = sbr.rel (0) target = $region17
    $region16: #{tpu_custom_call.1} parent=1 // pred_region
      %s33 = ssub.s32 2048, 2048
      %34 = vsyncadd [#allocation6], %s33
      %s35 = sshll.u32 [#allocation5], 4
      %s36 = int_to_ptr.vmem [resolvable:$true] %s35
      %41 = dma.hbm_to_vmem [thread:$0]  %s3, 2048, %s36, [#allocation6], 128, 128, 8
    $region17: #{tpu_custom_call.1} parent=1 // pred_fallthru
      _
    // Predicated region
    $region18: #{tpu_custom_call.1} parent=1 // pred_check
      _
    $region19: #{tpu_custom_call.1} parent=1 // pred_check_branch
      %43 = sbr.rel (0) target = $region21
    $region20: #{tpu_custom_call.1} parent=1 // pred_region
      %s45 = ssub.s32 2048, 2048
      %46 = vsyncadd [#allocation6], %s45
      %s47 = sshll.u32 [#allocation7], 4
      %s48 = int_to_ptr.vmem [resolvable:$true] %s47
      %53 = dma.hbm_to_vmem [thread:$0]  %s4, 2048, %s48, [#allocation6], 128, 128, 8
    $region21: #{tpu_custom_call.1} parent=1 // pred_fallthru
      _
    // Predicated region
    $region22: #{tpu_custom_call.1} parent=1 // pred_check
      _
    $region23: #{tpu_custom_call.1} parent=1 // pred_check_branch
      %55 = sbr.rel (0) target = $region25
    $region24: #{tpu_custom_call.1} parent=1 // pred_region
      _
    $region25: #{tpu_custom_call.1} parent=1 // pred_fallthru
      _
    // Predicated region
    $region26: #{tpu_custom_call.1} parent=1 // pred_check
      _
    $region27: #{tpu_custom_call.1} parent=1 // pred_check_branch
      %57 = sbr.rel (0) target = $region29
    $region28: #{tpu_custom_call.1} parent=1 // pred_region
      %58 = dma.done [#allocation3], 2048
    $region29: #{tpu_custom_call.1} parent=1 // pred_fallthru
      _
    // Predicated region
    $region30: #{tpu_custom_call.1} parent=1 // pred_check
      _
    $region31: #{tpu_custom_call.1} parent=1 // pred_check_branch
      %60 = sbr.rel (0) target = $region33
    $region32: #{tpu_custom_call.1} parent=1 // pred_region
      %61 = dma.done [#allocation6], 2048
    $region33: #{tpu_custom_call.1} parent=1 // pred_fallthru
      _
    // Predicated region
    $region34: #{tpu_custom_call.1} parent=1 // pred_check
      _
    $region35: #{tpu_custom_call.1} parent=1 // pred_check_branch
      %63 = sbr.rel (0) target = $region37
    $region36: #{tpu_custom_call.1} parent=1 // pred_region
      %64 = dma.done [#allocation6], 2048
    $region37: #{tpu_custom_call.1} parent=1 // pred_fallthru
      _
    %v65 = vld [vmem:[%s0] sm:$0xff]
    %v66 = vld [vmem:[%s0 + $0x8] sm:$0xff]
    %v67 = vld [vmem:[%s5] sm:$0xf]
    %v68 = vld [vmem:[%s1] sm:$0xff]
    %v69 = vlaneseq
    %v70 = vshrl.u32 %v69, 7
    %v71 = vsub.s32 0, %v70
    %v72 = vrot.slane %v67, %v71
    %vm73 = vcmask 64512
    %v75 = vsel %vm73, %v65, 0
    %v78 = vsel %vm73, %v66, 0
    %80 = vmatprep.subr.mxu0 0.0
    %81 = vmatpush1.msra.mxu0 0.0
    %82 = vmatprep.subr.mxu0 0.0
    %83 = vmatpush1.msra.mxu0 0.0
    %84 = vmatprep.subr.mxu0 0.0
    %85 = vmatpush1.msra.mxu0 0.0
    %86 = vmatprep.subr.mxu0 0.0
    %87 = vmatpush1.msra.mxu0 0.0
    %88 = vmatprep.subr.mxu0 0.0
    %89 = vmatpush1.msra.mxu0 0.0
    %90 = vmatprep.subr.mxu0 0.0
    %91 = vmatpush1.msra.mxu0 0.0
    %92 = vmatprep.subr.mxu0 0.0
    %93 = vmatpush1.msra.mxu0 0.0
    %94 = vmatprep.subr.mxu0 0.0
    %95 = vmatpush1.msra.mxu0 0.0
    %96 = vmatprep.subr.mxu0 0.0
    %97 = vmatpush1.msra.mxu0 0.0
    %98 = vmatprep.subr.mxu0 0.0
    %99 = vmatpush1.msra.mxu0 0.0
    %100 = vmatprep.subr.mxu0 0.0
    %101 = vmatpush1.msra.mxu0 0.0
    %102 = vmatprep.subr.mxu0 0.0
    %103 = vmatpush1.msra.mxu0 0.0
    %104 = vmatprep.subr.mxu0 0.0
    %105 = vmatpush1.msra.mxu0 0.0
    %106 = vmatprep.subr.mxu0 0.0
    %107 = vmatpush1.msra.mxu0 0.0
    %108 = vmatprep.subr.mxu0 0.0
    %109 = vmatpush1.msra.mxu0 0.0
    %110 = vmatprep.subr.mxu0 0.0
    %111 = vmatpush1.msra.mxu0 %v68
    %112 = vmatprep.subr.mxu0 0.0
    %113 = vmatpush2.msra.mxu0 0.0
    %114 = vmatprep.subr.mxu0 0.0
    %115 = vmatpush2.msra.mxu0 0.0
    %116 = vmatprep.subr.mxu0 0.0
    %117 = vmatpush2.msra.mxu0 0.0
    %118 = vmatprep.subr.mxu0 0.0
    %119 = vmatpush2.msra.mxu0 0.0
    %120 = vmatprep.subr.mxu0 0.0
    %121 = vmatpush2.msra.mxu0 0.0
    %122 = vmatprep.subr.mxu0 0.0
    %123 = vmatpush2.msra.mxu0 0.0
    %124 = vmatprep.subr.mxu0 0.0
    %125 = vmatpush2.msra.mxu0 0.0
    %126 = vmatprep.subr.mxu0 0.0
    %127 = vmatpush2.msra.mxu0 0.0
    %128 = vmatprep.subr.mxu0 0.0
    %129 = vmatpush2.msra.mxu0 0.0
    %130 = vmatprep.subr.mxu0 0.0
    %131 = vmatpush2.msra.mxu0 0.0
    %132 = vmatprep.subr.mxu0 0.0
    %133 = vmatpush2.msra.mxu0 0.0
    %134 = vmatprep.subr.mxu0 0.0
    %135 = vmatpush2.msra.mxu0 0.0
    %136 = vmatprep.subr.mxu0 0.0
    %137 = vmatpush2.msra.mxu0 0.0
    %138 = vmatprep.subr.mxu0 0.0
    %139 = vmatpush2.msra.mxu0 0.0
    %140 = vmatprep.subr.mxu0 0.0
    %141 = vmatpush2.msra.mxu0 0.0
    %142 = vmatprep.subr.mxu0 0.0
    %143 = vmatpush2.msra.mxu0 0.0
    %144 = vmatprep.mubr.f32.mxu0 0.0
    %145 = vmatmul.mubr.f32.gmra.mxu0 %v75
    %v146 = vpop.f32.mrf.mxu0
    %v147 = vadd.f32 %v72, %v146
    %v148 = vpop.f32.mrf.mxu0
    %149 = vmatprep.mubr.f32.mxu0 0.0
    %150 = vmatmul.mubr.f32.gmra.mxu0 %v78
    %v151 = vpop.f32.mrf.mxu0
    %v152 = vadd.f32 %v72, %v151
    %v153 = vpop.f32.mrf.mxu0
    %154 = vdwg.mxu0
    %v155 = vmax.f32 %v147, 0.0
    %v156 = vmax.f32 %v152, 0.0
    %v157 = vld [vmem:[#allocation2] sm:$0xff]
    %v158 = vld [vmem:[#allocation2 + $0x8] sm:$0xff]
    %v159 = vld [vmem:[#allocation2 + $0x10] sm:$0xff]
    %v160 = vld [vmem:[#allocation2 + $0x18] sm:$0xff]
    %v161 = vld [vmem:[#allocation2 + $0x20] sm:$0xff]
    %v162 = vld [vmem:[#allocation2 + $0x28] sm:$0xff]
    %v163 = vld [vmem:[#allocation2 + $0x30] sm:$0xff]
    %v164 = vld [vmem:[#allocation2 + $0x38] sm:$0xff]
    %v165 = vld [vmem:[#allocation2 + $0x40] sm:$0xff]
    %v166 = vld [vmem:[#allocation2 + $0x48] sm:$0xff]
    %v167 = vld [vmem:[#allocation2 + $0x50] sm:$0xff]
    %v168 = vld [vmem:[#allocation2 + $0x58] sm:$0xff]
    %v169 = vld [vmem:[#allocation2 + $0x60] sm:$0xff]
    %v170 = vld [vmem:[#allocation2 + $0x68] sm:$0xff]
    %v171 = vld [vmem:[#allocation2 + $0x70] sm:$0xff]
    %v172 = vld [vmem:[#allocation2 + $0x78] sm:$0xff]
    %v173 = vlaneseq
    %v174 = vshrl.u32 %v173, 7
    %v175 = vsub.s32 1, %v174
    %v176 = vrot.slane %v67, %v175
    %177 = vmatprep.subr.mxu0 0.0
    %178 = vmatpush1.msra.mxu0 %v172
    %179 = vmatprep.subr.mxu0 0.0
    %180 = vmatpush1.msra.mxu0 %v171
    %181 = vmatprep.subr.mxu0 0.0
    %182 = vmatpush1.msra.mxu0 %v170
    %183 = vmatprep.subr.mxu0 0.0
    %184 = vmatpush1.msra.mxu0 %v169
    %185 = vmatprep.subr.mxu0 0.0
    %186 = vmatpush1.msra.mxu0 %v168
    %187 = vmatprep.subr.mxu0 0.0
    %188 = vmatpush1.msra.mxu0 %v167
    %189 = vmatprep.subr.mxu0 0.0
    %190 = vmatpush1.msra.mxu0 %v166
    %191 = vmatprep.subr.mxu0 0.0
    %192 = vmatpush1.msra.mxu0 %v165
    %193 = vmatprep.subr.mxu0 0.0
    %194 = vmatpush1.msra.mxu0 %v164
    %195 = vmatprep.subr.mxu0 0.0
    %196 = vmatpush1.msra.mxu0 %v163
    %197 = vmatprep.subr.mxu0 0.0
    %198 = vmatpush1.msra.mxu0 %v162
    %199 = vmatprep.subr.mxu0 0.0
    %200 = vmatpush1.msra.mxu0 %v161
    %201 = vmatprep.subr.mxu0 0.0
    %202 = vmatpush1.msra.mxu0 %v160
    %203 = vmatprep.subr.mxu0 0.0
    %204 = vmatpush1.msra.mxu0 %v159
    %205 = vmatprep.subr.mxu0 0.0
    %206 = vmatpush1.msra.mxu0 %v158
    %207 = vmatprep.subr.mxu0 0.0
    %208 = vmatpush1.msra.mxu0 %v157
    %209 = vmatprep.subr.mxu0 0.0
    %210 = vmatpush2.msra.mxu0 0.0
    %211 = vmatprep.subr.mxu0 0.0
    %212 = vmatpush2.msra.mxu0 0.0
    %213 = vmatprep.subr.mxu0 0.0
    %214 = vmatpush2.msra.mxu0 0.0
    %215 = vmatprep.subr.mxu0 0.0
    %216 = vmatpush2.msra.mxu0 0.0
    %217 = vmatprep.subr.mxu0 0.0
    %218 = vmatpush2.msra.mxu0 0.0
    %219 = vmatprep.subr.mxu0 0.0
    %220 = vmatpush2.msra.mxu0 0.0
    %221 = vmatprep.subr.mxu0 0.0
    %222 = vmatpush2.msra.mxu0 0.0
    %223 = vmatprep.subr.mxu0 0.0
    %224 = vmatpush2.msra.mxu0 0.0
    %225 = vmatprep.subr.mxu0 0.0
    %226 = vmatpush2.msra.mxu0 0.0
    %227 = vmatprep.subr.mxu0 0.0
    %228 = vmatpush2.msra.mxu0 0.0
    %229 = vmatprep.subr.mxu0 0.0
    %230 = vmatpush2.msra.mxu0 0.0
    %231 = vmatprep.subr.mxu0 0.0
    %232 = vmatpush2.msra.mxu0 0.0
    %233 = vmatprep.subr.mxu0 0.0
    %234 = vmatpush2.msra.mxu0 0.0
    %235 = vmatprep.subr.mxu0 0.0
    %236 = vmatpush2.msra.mxu0 0.0
    %237 = vmatprep.subr.mxu0 0.0
    %238 = vmatpush2.msra.mxu0 0.0
    %239 = vmatprep.subr.mxu0 0.0
    %240 = vmatpush2.msra.mxu0 0.0
    %241 = vmatprep.mubr.f32.mxu0 0.0
    %242 = vmatmul.mubr.f32.gmra.mxu0 %v155
    %v243 = vpop.f32.mrf.mxu0
    %v244 = vadd.f32 %v176, %v243
    %v245 = vpop.f32.mrf.mxu0
    %246 = vmatprep.mubr.f32.mxu0 0.0
    %247 = vmatmul.mubr.f32.gmra.mxu0 %v156
    %v248 = vpop.f32.mrf.mxu0
    %v249 = vadd.f32 %v176, %v248
    %v250 = vpop.f32.mrf.mxu0
    %251 = vdwg.mxu0
    %v252 = vmax.f32 %v244, 0.0
    %v253 = vmax.f32 %v249, 0.0
    %v254 = vadd.f32 %v155, %v252
    %v255 = vadd.f32 %v156, %v253
    %v256 = vld [vmem:[#allocation5] sm:$0xff]
    %v257 = vld [vmem:[#allocation5 + $0x8] sm:$0xff]
    %v258 = vld [vmem:[#allocation5 + $0x10] sm:$0xff]
    %v259 = vld [vmem:[#allocation5 + $0x18] sm:$0xff]
    %v260 = vld [vmem:[#allocation5 + $0x20] sm:$0xff]
    %v261 = vld [vmem:[#allocation5 + $0x28] sm:$0xff]
    %v262 = vld [vmem:[#allocation5 + $0x30] sm:$0xff]
    %v263 = vld [vmem:[#allocation5 + $0x38] sm:$0xff]
    %v264 = vld [vmem:[#allocation5 + $0x40] sm:$0xff]
    %v265 = vld [vmem:[#allocation5 + $0x48] sm:$0xff]
    %v266 = vld [vmem:[#allocation5 + $0x50] sm:$0xff]
    %v267 = vld [vmem:[#allocation5 + $0x58] sm:$0xff]
    %v268 = vld [vmem:[#allocation5 + $0x60] sm:$0xff]
    %v269 = vld [vmem:[#allocation5 + $0x68] sm:$0xff]
    %v270 = vld [vmem:[#allocation5 + $0x70] sm:$0xff]
    %v271 = vld [vmem:[#allocation5 + $0x78] sm:$0xff]
    %v272 = vlaneseq
    %v273 = vshrl.u32 %v272, 7
    %v274 = vsub.s32 2, %v273
    %v275 = vrot.slane %v67, %v274
    %276 = vmatprep.subr.mxu0 0.0
    %277 = vmatpush1.msra.mxu0 %v271
    %278 = vmatprep.subr.mxu0 0.0
    %279 = vmatpush1.msra.mxu0 %v270
    %280 = vmatprep.subr.mxu0 0.0
    %281 = vmatpush1.msra.mxu0 %v269
    %282 = vmatprep.subr.mxu0 0.0
    %283 = vmatpush1.msra.mxu0 %v268
    %284 = vmatprep.subr.mxu0 0.0
    %285 = vmatpush1.msra.mxu0 %v267
    %286 = vmatprep.subr.mxu0 0.0
    %287 = vmatpush1.msra.mxu0 %v266
    %288 = vmatprep.subr.mxu0 0.0
    %289 = vmatpush1.msra.mxu0 %v265
    %290 = vmatprep.subr.mxu0 0.0
    %291 = vmatpush1.msra.mxu0 %v264
    %292 = vmatprep.subr.mxu0 0.0
    %293 = vmatpush1.msra.mxu0 %v263
    %294 = vmatprep.subr.mxu0 0.0
    %295 = vmatpush1.msra.mxu0 %v262
    %296 = vmatprep.subr.mxu0 0.0
    %297 = vmatpush1.msra.mxu0 %v261
    %298 = vmatprep.subr.mxu0 0.0
    %299 = vmatpush1.msra.mxu0 %v260
    %300 = vmatprep.subr.mxu0 0.0
    %301 = vmatpush1.msra.mxu0 %v259
    %302 = vmatprep.subr.mxu0 0.0
    %303 = vmatpush1.msra.mxu0 %v258
    %304 = vmatprep.subr.mxu0 0.0
    %305 = vmatpush1.msra.mxu0 %v257
    %306 = vmatprep.subr.mxu0 0.0
    %307 = vmatpush1.msra.mxu0 %v256
    %308 = vmatprep.subr.mxu0 0.0
    %309 = vmatpush2.msra.mxu0 0.0
    %310 = vmatprep.subr.mxu0 0.0
    %311 = vmatpush2.msra.mxu0 0.0
    %312 = vmatprep.subr.mxu0 0.0
    %313 = vmatpush2.msra.mxu0 0.0
    %314 = vmatprep.subr.mxu0 0.0
    %315 = vmatpush2.msra.mxu0 0.0
    %316 = vmatprep.subr.mxu0 0.0
    %317 = vmatpush2.msra.mxu0 0.0
    %318 = vmatprep.subr.mxu0 0.0
    %319 = vmatpush2.msra.mxu0 0.0
    %320 = vmatprep.subr.mxu0 0.0
    %321 = vmatpush2.msra.mxu0 0.0
    %322 = vmatprep.subr.mxu0 0.0
    %323 = vmatpush2.msra.mxu0 0.0
    %324 = vmatprep.subr.mxu0 0.0
    %325 = vmatpush2.msra.mxu0 0.0
    %326 = vmatprep.subr.mxu0 0.0
    %327 = vmatpush2.msra.mxu0 0.0
    %328 = vmatprep.subr.mxu0 0.0
    %329 = vmatpush2.msra.mxu0 0.0
    %330 = vmatprep.subr.mxu0 0.0
    %331 = vmatpush2.msra.mxu0 0.0
    %332 = vmatprep.subr.mxu0 0.0
    %333 = vmatpush2.msra.mxu0 0.0
    %334 = vmatprep.subr.mxu0 0.0
    %335 = vmatpush2.msra.mxu0 0.0
    %336 = vmatprep.subr.mxu0 0.0
    %337 = vmatpush2.msra.mxu0 0.0
    %338 = vmatprep.subr.mxu0 0.0
    %339 = vmatpush2.msra.mxu0 0.0
    %340 = vmatprep.mubr.f32.mxu0 0.0
    %341 = vmatmul.mubr.f32.gmra.mxu0 %v254
    %v342 = vpop.f32.mrf.mxu0
    %v343 = vadd.f32 %v275, %v342
    %v344 = vpop.f32.mrf.mxu0
    %345 = vmatprep.mubr.f32.mxu0 0.0
    %346 = vmatmul.mubr.f32.gmra.mxu0 %v255
    %v347 = vpop.f32.mrf.mxu0
    %v348 = vadd.f32 %v275, %v347
    %v349 = vpop.f32.mrf.mxu0
    %350 = vdwg.mxu0
    %v351 = vmax.f32 %v343, 0.0
    %v352 = vmax.f32 %v348, 0.0
    %v353 = vadd.f32 %v254, %v351
    %v354 = vadd.f32 %v255, %v352
    %v355 = vld [vmem:[#allocation7] sm:$0xff]
    %v356 = vld [vmem:[#allocation7 + $0x8] sm:$0xff]
    %v357 = vld [vmem:[#allocation7 + $0x10] sm:$0xff]
    %v358 = vld [vmem:[#allocation7 + $0x18] sm:$0xff]
    %v359 = vld [vmem:[#allocation7 + $0x20] sm:$0xff]
    %v360 = vld [vmem:[#allocation7 + $0x28] sm:$0xff]
    %v361 = vld [vmem:[#allocation7 + $0x30] sm:$0xff]
    %v362 = vld [vmem:[#allocation7 + $0x38] sm:$0xff]
    %v363 = vld [vmem:[#allocation7 + $0x40] sm:$0xff]
    %v364 = vld [vmem:[#allocation7 + $0x48] sm:$0xff]
    %v365 = vld [vmem:[#allocation7 + $0x50] sm:$0xff]
    %v366 = vld [vmem:[#allocation7 + $0x58] sm:$0xff]
    %v367 = vld [vmem:[#allocation7 + $0x60] sm:$0xff]
    %v368 = vld [vmem:[#allocation7 + $0x68] sm:$0xff]
    %v369 = vld [vmem:[#allocation7 + $0x70] sm:$0xff]
    %v370 = vld [vmem:[#allocation7 + $0x78] sm:$0xff]
    %v371 = vlaneseq
    %v372 = vshrl.u32 %v371, 7
    %v373 = vsub.s32 3, %v372
    %v374 = vrot.slane %v67, %v373
    %375 = vmatprep.subr.mxu0 0.0
    %376 = vmatpush1.msra.mxu0 %v370
    %377 = vmatprep.subr.mxu0 0.0
    %378 = vmatpush1.msra.mxu0 %v369
    %379 = vmatprep.subr.mxu0 0.0
    %380 = vmatpush1.msra.mxu0 %v368
    %381 = vmatprep.subr.mxu0 0.0
    %382 = vmatpush1.msra.mxu0 %v367
    %383 = vmatprep.subr.mxu0 0.0
    %384 = vmatpush1.msra.mxu0 %v366
    %385 = vmatprep.subr.mxu0 0.0
    %386 = vmatpush1.msra.mxu0 %v365
    %387 = vmatprep.subr.mxu0 0.0
    %388 = vmatpush1.msra.mxu0 %v364
    %389 = vmatprep.subr.mxu0 0.0
    %390 = vmatpush1.msra.mxu0 %v363
    %391 = vmatprep.subr.mxu0 0.0
    %392 = vmatpush1.msra.mxu0 %v362
    %393 = vmatprep.subr.mxu0 0.0
    %394 = vmatpush1.msra.mxu0 %v361
    %395 = vmatprep.subr.mxu0 0.0
    %396 = vmatpush1.msra.mxu0 %v360
    %397 = vmatprep.subr.mxu0 0.0
    %398 = vmatpush1.msra.mxu0 %v359
    %399 = vmatprep.subr.mxu0 0.0
    %400 = vmatpush1.msra.mxu0 %v358
    %401 = vmatprep.subr.mxu0 0.0
    %402 = vmatpush1.msra.mxu0 %v357
    %403 = vmatprep.subr.mxu0 0.0
    %404 = vmatpush1.msra.mxu0 %v356
    %405 = vmatprep.subr.mxu0 0.0
    %406 = vmatpush1.msra.mxu0 %v355
    %407 = vmatprep.subr.mxu0 0.0
    %408 = vmatpush2.msra.mxu0 0.0
    %409 = vmatprep.subr.mxu0 0.0
    %410 = vmatpush2.msra.mxu0 0.0
    %411 = vmatprep.subr.mxu0 0.0
    %412 = vmatpush2.msra.mxu0 0.0
    %413 = vmatprep.subr.mxu0 0.0
    %414 = vmatpush2.msra.mxu0 0.0
    %415 = vmatprep.subr.mxu0 0.0
    %416 = vmatpush2.msra.mxu0 0.0
    %417 = vmatprep.subr.mxu0 0.0
    %418 = vmatpush2.msra.mxu0 0.0
    %419 = vmatprep.subr.mxu0 0.0
    %420 = vmatpush2.msra.mxu0 0.0
    %421 = vmatprep.subr.mxu0 0.0
    %422 = vmatpush2.msra.mxu0 0.0
    %423 = vmatprep.subr.mxu0 0.0
    %424 = vmatpush2.msra.mxu0 0.0
    %425 = vmatprep.subr.mxu0 0.0
    %426 = vmatpush2.msra.mxu0 0.0
    %427 = vmatprep.subr.mxu0 0.0
    %428 = vmatpush2.msra.mxu0 0.0
    %429 = vmatprep.subr.mxu0 0.0
    %430 = vmatpush2.msra.mxu0 0.0
    %431 = vmatprep.subr.mxu0 0.0
    %432 = vmatpush2.msra.mxu0 0.0
    %433 = vmatprep.subr.mxu0 0.0
    %434 = vmatpush2.msra.mxu0 0.0
    %435 = vmatprep.subr.mxu0 0.0
    %436 = vmatpush2.msra.mxu0 0.0
    %437 = vmatprep.subr.mxu0 0.0
    %438 = vmatpush2.msra.mxu0 0.0
    %439 = vmatprep.mubr.f32.mxu0 0.0
    %440 = vmatmul.mubr.f32.gmra.mxu0 %v353
    %v441 = vpop.f32.mrf.mxu0
    %v442 = vadd.f32 %v374, %v441
    %v443 = vpop.f32.mrf.mxu0
    %444 = vmatprep.mubr.f32.mxu0 0.0
    %445 = vmatmul.mubr.f32.gmra.mxu0 %v354
    %v446 = vpop.f32.mrf.mxu0
    %v447 = vadd.f32 %v374, %v446
    %v448 = vpop.f32.mrf.mxu0
    %449 = vdwg.mxu0
    %v450 = vadd.f32 %v353, %v442
    %v451 = vadd.f32 %v354, %v447
    %452 = vst [vmem:[#allocation8] sm:$0xff] %v450
    %453 = vst [vmem:[#allocation8 + $0x8] sm:$0xff] %v451
    // Predicated region
    $region38: #{tpu_custom_call.1} parent=1 // pred_check
      _
    $region39: #{tpu_custom_call.1} parent=1 // pred_check_branch
      %455 = sbr.rel (0) target = $region41
    $region40: #{tpu_custom_call.1} parent=1 // pred_region
      %s457 = ssub.s32 256, 256
      %458 = vsyncadd [#allocation4], %s457
      %s459 = sshll.u32 [#allocation8], 4
      %s460 = int_to_ptr.vmem [resolvable:$true] %s459
      %465 = dma.vmem_to_hbm [thread:$0]  %s460, 256, %s6, [#allocation4], 128, 128, 8
    $region41: #{tpu_custom_call.1} parent=1 // pred_fallthru
      _
    // Predicated region
    $region42: #{tpu_custom_call.1} parent=1 // pred_check
      _
    $region43: #{tpu_custom_call.1} parent=1 // pred_check_branch
      %467 = sbr.rel (0) target = $region45
    $region44: #{tpu_custom_call.1} parent=1 // pred_region
      %468 = dma.done [#allocation4], 256
    $region45: #{tpu_custom_call.1} parent=1 // pred_fallthru
      _
    %469 = vsyncpa [#allocation3], 1
    %470 = vsyncpa [#allocation6], 1
    %471 = vsyncpa [#allocation4], 1

</llo_original>
